<compile_context>
chip_gen: v7x
topology: tpu7x:2x2x1
jax: 0.10.0
libtpu: 0.0.40
codegen_flags: <defaults>
</compile_context>

<pallas_src>
import functools

import jax
import jax.numpy as jnp
from jax.experimental import pallas as pl
from jax.experimental.pallas import tpu as pltpu

ACT_THRES = 6.0
BN_EPS = 1e-5


def _conv_bn_act_kernel(x_ref, w_ref, mask_ref, gamma_ref, beta_ref, out_ref,
                        *, k, W, N, HoW_pad, inv_m_valid):
    """Fully fused ConvBlock forward; runs once (grid=(1,)).

    x_ref:     (N, Cin, HWp)        lane-padded, row-major flattened images
    w_ref:     (Cout, k*k*Cin)      tap-major flattened conv weight
    mask_ref:  (1, N*HoW_pad)       1.0 on valid output columns, 0.0 elsewhere
    gamma_ref: (Cout, 1)            BatchNorm weight
    beta_ref:  (Cout, 1)            BatchNorm bias
    out_ref:   (N, Cout, HoW_pad)   clip(BN(conv), 0, 6), "loose" column layout
    """
    kk = k * k

    # im2col RHS for the whole batch.  Row index r = t*Cin + ci (tap-major),
    # column index = image * HoW_pad + loose output position.  In the flattened
    # layout a lane offset of kh*W + kw aligns input pixel (ho+kh, wo+kw) with
    # output pixel (ho, wo); row-boundary spill only lands in masked columns.
    cols = []
    for n in range(N):
        xn = x_ref[n]                                         # (Cin, HWp)
        taps = []
        for t in range(kk):
            off = (t // k) * W + (t % k)
            taps.append(xn[:, off:off + HoW_pad])             # (Cin, HoW_pad)
        cols.append(jnp.concatenate(taps, axis=0))            # (kk*Cin, HoW_pad)
    rhs = jnp.concatenate(cols, axis=1)                       # (kk*Cin, N*HoW_pad)

    # One stacked-K MXU matmul for the whole batch (accumulation stays in MXU).
    conv = jnp.dot(w_ref[...], rhs,
                   preferred_element_type=jnp.float32)        # (Cout, N*HoW_pad)

    # Exact training-mode BatchNorm statistics over valid columns only.
    mask = mask_ref[...]                                      # (1, N*HoW_pad)
    s = jnp.sum(conv * mask, axis=1, keepdims=True)           # (Cout, 1)
    mean = s * inv_m_valid
    d = (conv - mean) * mask
    var = jnp.sum(d * d, axis=1, keepdims=True) * inv_m_valid  # biased variance
    inv_std = jax.lax.rsqrt(var + BN_EPS)

    # Fold BN into a single per-channel FMA, then ReLU6.
    scale = gamma_ref[...] * inv_std                          # (Cout, 1)
    shift = beta_ref[...] - mean * scale                      # (Cout, 1)
    y = jnp.clip(conv * scale + shift, 0.0, ACT_THRES)        # (Cout, N*HoW_pad)

    # Full-width (multiple-of-128 lane) unmasked stores, one image at a time.
    for n in range(N):
        out_ref[n] = y[:, n * HoW_pad:(n + 1) * HoW_pad]


@functools.partial(jax.jit, static_argnames=("kernel_size", "stride", "padding"))
def conv_block_forward(x, weight, gamma, beta, *, kernel_size=3, stride=1, padding=0):
    """x: (N, Cin, H, W) NCHW f32; weight: (Cout, Cin, k, k); gamma/beta: (Cout,).

    Matches ConvBlock.forward in training mode (batch statistics, biased var).
    """
    # TODO(synk): AddDropMRRBlockConv2d derives its effective weight from MRR
    # phase blocks (miniblock / MRRConfig); an equivalent dense conv weight is
    # used directly.  stride != 1, dilation != 1, groups != 1 and bias=True are
    # not implemented; BN running-stat tracking (eval mode) is not emitted.
    assert stride == 1, "TODO(synk): only stride=1 is implemented"
    k = kernel_size
    if padding:
        x = jnp.pad(x, ((0, 0), (0, 0), (padding, padding), (padding, padding)))
    N, Cin, H, W = x.shape
    Cout = weight.shape[0]
    Ho, Wo = H - k + 1, W - k + 1
    HoW = Ho * W                                    # "loose" columns per image
    HoW_pad = ((HoW + 127) // 128) * 128            # lane-dense store width
    HWp = (k - 1) * (W + 1) + HoW_pad               # every tap slice stays in-bounds

    # Free reshape + small lane pad; the image goes through HBM exactly once.
    x_flat = jnp.pad(x.reshape(N, Cin, H * W), ((0, 0), (0, 0), (0, HWp - H * W)))
    # w_flat[co, t*Cin + ci] = weight[co, ci, kh, kw], with t = kh*k + kw.
    w_flat = jnp.transpose(weight, (0, 2, 3, 1)).reshape(Cout, k * k * Cin)
    # TODO(synk): for larger Cin/Cout/HoW cast x_flat / w_flat to bf16 (MXU-native);
    # kept f32 here to stay comfortably inside the 2e-4 parity tolerance.

    # Valid-column mask: column c is valid iff c < Ho*W and (c % W) < Wo.
    # Built once at trace time from static shapes -> constant-folded by XLA.
    col = jnp.arange(HoW_pad, dtype=jnp.int32)
    valid = ((col < HoW) & ((col % W) < Wo)).astype(jnp.float32)
    mask = jnp.tile(valid, (N,)).reshape(1, N * HoW_pad)

    m_valid = N * Ho * Wo
    gamma2 = gamma.reshape(Cout, 1).astype(jnp.float32)
    beta2 = beta.reshape(Cout, 1).astype(jnp.float32)

    kernel = functools.partial(
        _conv_bn_act_kernel, k=k, W=W, N=N, HoW_pad=HoW_pad,
        inv_m_valid=1.0 / m_valid)

    flops = 2 * Cout * (k * k * Cin) * N * HoW_pad + 10 * Cout * N * HoW_pad
    bytes_acc = 4 * (N * Cin * HWp + Cout * k * k * Cin + N * HoW_pad
                     + 4 * Cout + N * Cout * HoW_pad)

    out_loose = pl.pallas_call(
        kernel,
        out_shape=jax.ShapeDtypeStruct((N, Cout, HoW_pad), jnp.float32),
        grid=(1,),
        in_specs=[
            pl.BlockSpec((N, Cin, HWp), lambda i: (0, 0, 0)),
            pl.BlockSpec((Cout, k * k * Cin), lambda i: (0, 0)),
            pl.BlockSpec((1, N * HoW_pad), lambda i: (0, 0)),
            pl.BlockSpec((Cout, 1), lambda i: (0, 0)),
            pl.BlockSpec((Cout, 1), lambda i: (0, 0)),
        ],
        out_specs=pl.BlockSpec((N, Cout, HoW_pad), lambda i: (0, 0, 0)),
        compiler_params=pltpu.CompilerParams(
            dimension_semantics=("arbitrary",)),   # single step; no megacore split
        cost_estimate=pl.CostEstimate(
            flops=flops, transcendentals=Cout, bytes_accessed=bytes_acc),
    )(x_flat, w_flat, mask, gamma2, beta2)

    # TODO(synk): a downstream consumer should read the padded slab directly;
    # this compaction is only materialized for the standalone parity check.
    return out_loose[:, :, :HoW].reshape(N, Cout, Ho, W)[:, :, :, :Wo]


def _reference(x, weight, gamma, beta, stride=1):
    conv = jax.lax.conv_general_dilated(
        x, weight, window_strides=(stride, stride), padding="VALID",
        dimension_numbers=("NCHW", "OIHW", "NCHW"))
    mean = jnp.mean(conv, axis=(0, 2, 3), keepdims=True)
    var = jnp.mean((conv - mean) ** 2, axis=(0, 2, 3), keepdims=True)
    y = (conv - mean) * jax.lax.rsqrt(var + BN_EPS)
    y = y * gamma.reshape(1, -1, 1, 1) + beta.reshape(1, -1, 1, 1)
    return jnp.clip(y, 0.0, ACT_THRES)


if __name__ == "__main__":
    # ConvBlock(in_channel=4, out_channel=8, kernel_size=3, stride=1, padding=0,
    #           bias=False, act_thres=6) on a (2, 4, 16, 16) input.
    N, Cin, Hs, Ws = 2, 4, 16, 16
    Cout, ksize, stride = 8, 3, 1

    key = jax.random.PRNGKey(0)
    kx, kw = jax.random.split(key)
    x = jax.random.normal(kx, (N, Cin, Hs, Ws), dtype=jnp.float32)
    weight = jax.random.normal(kw, (Cout, Cin, ksize, ksize), dtype=jnp.float32) * 0.1
    gamma = jnp.ones((Cout,), dtype=jnp.float32)   # BatchNorm2d default init
    beta = jnp.zeros((Cout,), dtype=jnp.float32)

    out = conv_block_forward(x, weight, gamma, beta,
                             kernel_size=ksize, stride=stride)
    out = jax.block_until_ready(out)

    ref = _reference(x, weight, gamma, beta, stride)
    assert out.shape == (N, Cout, 14, 14), out.shape
    err = float(jnp.max(jnp.abs(out - ref)))
    assert err < 2e-4, err
    print("KERNEL_OK")
</pallas_src>

<mosaic_0001>
module attributes {stable_mosaic.version = 11 : i64} {
  func.func @_conv_bn_act_kernel(%arg0: i32, %arg1: memref<2x4x290xf32, #tpu.memory_space<vmem>>, %arg2: memref<8x36xf32, #tpu.memory_space<vmem>>, %arg3: memref<1x512xf32, #tpu.memory_space<vmem>>, %arg4: memref<8x1xf32, #tpu.memory_space<vmem>>, %arg5: memref<8x1xf32, #tpu.memory_space<vmem>>, %arg6: memref<2x8x256xf32, #tpu.memory_space<vmem>>) attributes {dimension_semantics = [#tpu.dimension_semantics<arbitrary>], iteration_bounds = array<i64: 1>, scalar_prefetch = 0 : i64, scratch_operands = 0 : i64, tpu.core_type = #tpu.core_type<tc>, window_params = [{pipeline_mode = #tpu.pipeline_mode<synchronous>, transform_indices = @transform_0, window_bounds = array<i64: 2, 4, 290>}, {pipeline_mode = #tpu.pipeline_mode<synchronous>, transform_indices = @transform_1, window_bounds = array<i64: 8, 36>}, {pipeline_mode = #tpu.pipeline_mode<synchronous>, transform_indices = @transform_2, window_bounds = array<i64: 1, 512>}, {pipeline_mode = #tpu.pipeline_mode<synchronous>, transform_indices = @transform_3, window_bounds = array<i64: 8, 1>}, {pipeline_mode = #tpu.pipeline_mode<synchronous>, transform_indices = @transform_4, window_bounds = array<i64: 8, 1>}, {pipeline_mode = #tpu.pipeline_mode<synchronous>, transform_indices = @transform_5, window_bounds = array<i64: 2, 8, 256>}]} {
    %c0 = arith.constant 0 : index
    %c0_0 = arith.constant 0 : index
    %c0_1 = arith.constant 0 : index
    %0 = vector.load %arg1[%c0, %c0_0, %c0_1] : memref<2x4x290xf32, #tpu.memory_space<vmem>>, vector<1x4x290xf32>
    %1 = vector.shape_cast %0 : vector<1x4x290xf32> to vector<4x290xf32>
    %2 = vector.extract_strided_slice %1 {offsets = [0, 0], sizes = [4, 256], strides = [1, 1]} : vector<4x290xf32> to vector<4x256xf32>
    %3 = vector.extract_strided_slice %1 {offsets = [0, 1], sizes = [4, 256], strides = [1, 1]} : vector<4x290xf32> to vector<4x256xf32>
    %4 = vector.extract_strided_slice %1 {offsets = [0, 2], sizes = [4, 256], strides = [1, 1]} : vector<4x290xf32> to vector<4x256xf32>
    %5 = vector.extract_strided_slice %1 {offsets = [0, 16], sizes = [4, 256], strides = [1, 1]} : vector<4x290xf32> to vector<4x256xf32>
    %6 = vector.extract_strided_slice %1 {offsets = [0, 17], sizes = [4, 256], strides = [1, 1]} : vector<4x290xf32> to vector<4x256xf32>
    %7 = vector.extract_strided_slice %1 {offsets = [0, 18], sizes = [4, 256], strides = [1, 1]} : vector<4x290xf32> to vector<4x256xf32>
    %8 = vector.extract_strided_slice %1 {offsets = [0, 32], sizes = [4, 256], strides = [1, 1]} : vector<4x290xf32> to vector<4x256xf32>
    %9 = vector.extract_strided_slice %1 {offsets = [0, 33], sizes = [4, 256], strides = [1, 1]} : vector<4x290xf32> to vector<4x256xf32>
    %10 = vector.extract_strided_slice %1 {offsets = [0, 34], sizes = [4, 256], strides = [1, 1]} : vector<4x290xf32> to vector<4x256xf32>
    %11 = tpu.concatenate %2, %3, %4, %5, %6, %7, %8, %9, %10 in 0 : vector<4x256xf32>, vector<4x256xf32>, vector<4x256xf32>, vector<4x256xf32>, vector<4x256xf32>, vector<4x256xf32>, vector<4x256xf32>, vector<4x256xf32>, vector<4x256xf32> -> vector<36x256xf32>
    %c1 = arith.constant 1 : index
    %c0_2 = arith.constant 0 : index
    %c0_3 = arith.constant 0 : index
    %12 = vector.load %arg1[%c1, %c0_2, %c0_3] : memref<2x4x290xf32, #tpu.memory_space<vmem>>, vector<1x4x290xf32>
    %13 = vector.shape_cast %12 : vector<1x4x290xf32> to vector<4x290xf32>
    %14 = vector.extract_strided_slice %13 {offsets = [0, 0], sizes = [4, 256], strides = [1, 1]} : vector<4x290xf32> to vector<4x256xf32>
    %15 = vector.extract_strided_slice %13 {offsets = [0, 1], sizes = [4, 256], strides = [1, 1]} : vector<4x290xf32> to vector<4x256xf32>
    %16 = vector.extract_strided_slice %13 {offsets = [0, 2], sizes = [4, 256], strides = [1, 1]} : vector<4x290xf32> to vector<4x256xf32>
    %17 = vector.extract_strided_slice %13 {offsets = [0, 16], sizes = [4, 256], strides = [1, 1]} : vector<4x290xf32> to vector<4x256xf32>
    %18 = vector.extract_strided_slice %13 {offsets = [0, 17], sizes = [4, 256], strides = [1, 1]} : vector<4x290xf32> to vector<4x256xf32>
    %19 = vector.extract_strided_slice %13 {offsets = [0, 18], sizes = [4, 256], strides = [1, 1]} : vector<4x290xf32> to vector<4x256xf32>
    %20 = vector.extract_strided_slice %13 {offsets = [0, 32], sizes = [4, 256], strides = [1, 1]} : vector<4x290xf32> to vector<4x256xf32>
    %21 = vector.extract_strided_slice %13 {offsets = [0, 33], sizes = [4, 256], strides = [1, 1]} : vector<4x290xf32> to vector<4x256xf32>
    %22 = vector.extract_strided_slice %13 {offsets = [0, 34], sizes = [4, 256], strides = [1, 1]} : vector<4x290xf32> to vector<4x256xf32>
    %23 = tpu.concatenate %14, %15, %16, %17, %18, %19, %20, %21, %22 in 0 : vector<4x256xf32>, vector<4x256xf32>, vector<4x256xf32>, vector<4x256xf32>, vector<4x256xf32>, vector<4x256xf32>, vector<4x256xf32>, vector<4x256xf32>, vector<4x256xf32> -> vector<36x256xf32>
    %24 = tpu.concatenate %11, %23 in 1 : vector<36x256xf32>, vector<36x256xf32> -> vector<36x512xf32>
    %c0_4 = arith.constant 0 : index
    %c0_5 = arith.constant 0 : index
    %25 = vector.load %arg2[%c0_4, %c0_5] : memref<8x36xf32, #tpu.memory_space<vmem>>, vector<8x36xf32>
    %cst = arith.constant dense<0.000000e+00> : vector<8x512xf32>
    %26 = tpu.matmul %25, %24, %cst {dimension_numbers = #tpu.dot_dimension_numbers<[1], [0], [0], [1], [0, 0, 1, 1], [], []>} : vector<8x36xf32>, vector<36x512xf32>, vector<8x512xf32> -> vector<8x512xf32>
    %c0_6 = arith.constant 0 : index
    %c0_7 = arith.constant 0 : index
    %27 = vector.load %arg3[%c0_6, %c0_7] : memref<1x512xf32, #tpu.memory_space<vmem>>, vector<1x512xf32>
    %28 = vector.broadcast %27 : vector<1x512xf32> to vector<8x512xf32>
    %29 = arith.mulf %26, %28 : vector<8x512xf32>
    %cst_8 = arith.constant dense<0.000000e+00> : vector<8xf32>
    %30 = vector.multi_reduction <add>, %29, %cst_8 [1] : vector<8x512xf32> to vector<8xf32>
    %31 = vector.shape_cast %30 : vector<8xf32> to vector<8x1xf32>
    %cst_9 = arith.constant 0.00255102036 : f32
    %32 = vector.broadcast %cst_9 : f32 to vector<8x1xf32>
    %33 = arith.mulf %31, %32 : vector<8x1xf32>
    %34 = vector.broadcast %33 : vector<8x1xf32> to vector<8x512xf32>
    %35 = arith.subf %26, %34 : vector<8x512xf32>
    %36 = vector.broadcast %27 : vector<1x512xf32> to vector<8x512xf32>
    %37 = arith.mulf %35, %36 : vector<8x512xf32>
    %38 = arith.mulf %37, %37 : vector<8x512xf32>
    %cst_10 = arith.constant dense<0.000000e+00> : vector<8xf32>
    %39 = vector.multi_reduction <add>, %38, %cst_10 [1] : vector<8x512xf32> to vector<8xf32>
    %40 = vector.shape_cast %39 : vector<8xf32> to vector<8x1xf32>
    %cst_11 = arith.constant 0.00255102036 : f32
    %41 = vector.broadcast %cst_11 : f32 to vector<8x1xf32>
    %42 = arith.mulf %40, %41 : vector<8x1xf32>
    %cst_12 = arith.constant 9.99999974E-6 : f32
    %43 = vector.broadcast %cst_12 : f32 to vector<8x1xf32>
    %44 = arith.addf %42, %43 : vector<8x1xf32>
    %45 = math.rsqrt %44 : vector<8x1xf32>
    %c0_13 = arith.constant 0 : index
    %c0_14 = arith.constant 0 : index
    %46 = vector.load %arg4[%c0_13, %c0_14] : memref<8x1xf32, #tpu.memory_space<vmem>>, vector<8x1xf32>
    %47 = arith.mulf %46, %45 : vector<8x1xf32>
    %c0_15 = arith.constant 0 : index
    %c0_16 = arith.constant 0 : index
    %48 = vector.load %arg5[%c0_15, %c0_16] : memref<8x1xf32, #tpu.memory_space<vmem>>, vector<8x1xf32>
    %49 = arith.mulf %33, %47 : vector<8x1xf32>
    %50 = arith.subf %48, %49 : vector<8x1xf32>
    %51 = vector.broadcast %47 : vector<8x1xf32> to vector<8x512xf32>
    %52 = arith.mulf %26, %51 : vector<8x512xf32>
    %53 = vector.broadcast %50 : vector<8x1xf32> to vector<8x512xf32>
    %54 = arith.addf %52, %53 : vector<8x512xf32>
    %cst_17 = arith.constant 0.000000e+00 : f32
    %cst_18 = arith.constant 6.000000e+00 : f32
    %55 = vector.broadcast %cst_17 : f32 to vector<8x512xf32>
    %56 = arith.maximumf %55, %54 : vector<8x512xf32>
    %57 = vector.broadcast %cst_18 : f32 to vector<8x512xf32>
    %58 = arith.minimumf %57, %56 : vector<8x512xf32>
    %59 = vector.extract_strided_slice %58 {offsets = [0, 0], sizes = [8, 256], strides = [1, 1]} : vector<8x512xf32> to vector<8x256xf32>
    %c0_19 = arith.constant 0 : index
    %c0_20 = arith.constant 0 : index
    %c0_21 = arith.constant 0 : index
    %60 = vector.load %arg6[%c0_19, %c0_20, %c0_21] : memref<2x8x256xf32, #tpu.memory_space<vmem>>, vector<1x8x256xf32>
    %61 = vector.shape_cast %60 : vector<1x8x256xf32> to vector<8x256xf32>
    %62 = vector.shape_cast %59 : vector<8x256xf32> to vector<1x8x256xf32>
    tpu.vector_store %arg6[%c0_19, %c0_20, %c0_21], %62 {strides = array<i32>} : memref<2x8x256xf32, #tpu.memory_space<vmem>>, vector<1x8x256xf32>,
    %63 = vector.extract_strided_slice %58 {offsets = [0, 256], sizes = [8, 256], strides = [1, 1]} : vector<8x512xf32> to vector<8x256xf32>
    %c1_22 = arith.constant 1 : index
    %c0_23 = arith.constant 0 : index
    %c0_24 = arith.constant 0 : index
    %64 = vector.load %arg6[%c1_22, %c0_23, %c0_24] : memref<2x8x256xf32, #tpu.memory_space<vmem>>, vector<1x8x256xf32>
    %65 = vector.shape_cast %64 : vector<1x8x256xf32> to vector<8x256xf32>
    %66 = vector.shape_cast %63 : vector<8x256xf32> to vector<1x8x256xf32>
    tpu.vector_store %arg6[%c1_22, %c0_23, %c0_24], %66 {strides = array<i32>} : memref<2x8x256xf32, #tpu.memory_space<vmem>>, vector<1x8x256xf32>,
    return
  }
  func.func @transform_0(%arg0: i32) -> (i32, i32, i32) {
    %c0_i32 = arith.constant 0 : i32
    %c0_i32_0 = arith.constant 0 : i32
    %c0_i32_1 = arith.constant 0 : i32
    %c0_i32_2 = arith.constant 0 : i32
    return %c0_i32, %c0_i32_0, %c0_i32_1 : i32, i32, i32
  }
  func.func @transform_1(%arg0: i32) -> (i32, i32) {
    %c0_i32 = arith.constant 0 : i32
    %c0_i32_0 = arith.constant 0 : i32
    %c0_i32_1 = arith.constant 0 : i32
    return %c0_i32, %c0_i32_0 : i32, i32
  }
  func.func @transform_2(%arg0: i32) -> (i32, i32) {
    %c0_i32 = arith.constant 0 : i32
    %c0_i32_0 = arith.constant 0 : i32
    %c0_i32_1 = arith.constant 0 : i32
    return %c0_i32, %c0_i32_0 : i32, i32
  }
  func.func @transform_3(%arg0: i32) -> (i32, i32) {
    %c0_i32 = arith.constant 0 : i32
    %c0_i32_0 = arith.constant 0 : i32
    %c0_i32_1 = arith.constant 0 : i32
    return %c0_i32, %c0_i32_0 : i32, i32
  }
  func.func @transform_4(%arg0: i32) -> (i32, i32) {
    %c0_i32 = arith.constant 0 : i32
    %c0_i32_0 = arith.constant 0 : i32
    %c0_i32_1 = arith.constant 0 : i32
    return %c0_i32, %c0_i32_0 : i32, i32
  }
  func.func @transform_5(%arg0: i32) -> (i32, i32, i32) {
    %c0_i32 = arith.constant 0 : i32
    %c0_i32_0 = arith.constant 0 : i32
    %c0_i32_1 = arith.constant 0 : i32
    %c0_i32_2 = arith.constant 0 : i32
    return %c0_i32, %c0_i32_0, %c0_i32_1 : i32, i32, i32
  }
}

</mosaic_0001>

<llo_original>
// kernel: conv_block_forward.1
$region0: #{conv_block_forward.1}
  #allocation0 [shape = 'u32[]', space=smem, size = 0x4, offset = 0x4, fixed_abs, tag = 'smem constant byte address 0x4 - core index']
  #allocation1 [shape = 'u32[144,128]{1,0:T(1,128)}', space=vmem, size = 0x12000, scoped, tag = 'internal scratch']
  %s0 = inlined_call_operand.vmem [shape: f32[2,4,290], index: 0, kind: input, shape index: {}]
  %s1 = inlined_call_operand.vmem [shape: f32[8,36], index: 1, kind: input, shape index: {}]
  %s2 = inlined_call_operand.vmem [shape: f32[1,512], index: 2, kind: input, shape index: {}]
  %s3 = inlined_call_operand.vmem [shape: f32[8,1], index: 3, kind: input, shape index: {}]
  %s4 = inlined_call_operand.vmem [shape: f32[8,1], index: 4, kind: input, shape index: {}]
  %s5 = inlined_call_operand.vmem [shape: f32[2,8,256], index: 5, kind: output, shape index: {}]
  %s6 = sld [smem:[#allocation0]]
  $region30: #{conv_block_forward.1} parent=0
    _
  %s8 = ssub.s32 1, %s6
  %s9 = scalar_select 0, %s8, %s6
  // Predicated region
  $region2: #{conv_block_forward.1} parent=0 // pred_check
    _
  $region3: #{conv_block_forward.1} parent=0 // pred_check_branch
    %11 = sbr.rel (0) target = $region5
  $region4: #{conv_block_forward.1} parent=0 // pred_region
    _
  $region5: #{conv_block_forward.1} parent=0 // pred_fallthru
    _
  // Predicated region
  $region6: #{conv_block_forward.1} parent=0 // pred_check
    _
  $region7: #{conv_block_forward.1} parent=0 // pred_check_branch
    %13 = sbr.rel (0) target = $region9
  $region8: #{conv_block_forward.1} parent=0 // pred_region
    _
  $region9: #{conv_block_forward.1} parent=0 // pred_fallthru
    _
  // Predicated region
  $region10: #{conv_block_forward.1} parent=0 // pred_check
    _
  $region11: #{conv_block_forward.1} parent=0 // pred_check_branch
    %15 = sbr.rel (0) target = $region13
  $region12: #{conv_block_forward.1} parent=0 // pred_region
    _
  $region13: #{conv_block_forward.1} parent=0 // pred_fallthru
    _
  // Predicated region
  $region14: #{conv_block_forward.1} parent=0 // pred_check
    _
  $region15: #{conv_block_forward.1} parent=0 // pred_check_branch
    %17 = sbr.rel (0) target = $region17
  $region16: #{conv_block_forward.1} parent=0 // pred_region
    _
  $region17: #{conv_block_forward.1} parent=0 // pred_fallthru
    _
  // Predicated region
  $region18: #{conv_block_forward.1} parent=0 // pred_check
    _
  $region19: #{conv_block_forward.1} parent=0 // pred_check_branch
    %19 = sbr.rel (0) target = $region21
  $region20: #{conv_block_forward.1} parent=0 // pred_region
    _
  $region21: #{conv_block_forward.1} parent=0 // pred_fallthru
    _
  %v20 = vld [vmem:[%s0] sm:$0xff]
  %v21 = vld [vmem:[%s0 + $0x8] sm:$0xf]
  %v23 = vcombine.high %v20, %v20
  %v26 = vcombine.low %v20, %v20
  %v27 = vcombine.low %v21, %v21
  %28 = vrot.lane.b32.xlu0 %v26, 127
  %v29 = vpop.permute.xlu0 %28
  %30 = vrot.lane.b32.xlu0 %v20, 127
  %v31 = vpop.permute.xlu0 %30
  %32 = vrot.lane.b32.xlu0 %v27, 127
  %v33 = vpop.permute.xlu0 %32
  %vm34 = vcmask 1039360
  %v35 = vsel %vm34, %v29, %v31
  %v36 = vsel %vm34, %v31, %v33
  %39 = vrot.lane.b32.xlu0 %v20, 126
  %v40 = vpop.permute.xlu0 %39
  %41 = vrot.lane.b32.xlu0 %v23, 126
  %v42 = vpop.permute.xlu0 %41
  %43 = vrot.lane.b32.xlu0 %v21, 126
  %v44 = vpop.permute.xlu0 %43
  %vm45 = vcmask 1031168
  %v46 = vsel %vm45, %v40, %v42
  %v47 = vsel %vm45, %v42, %v44
  %50 = vrot.lane.b32.xlu0 %v26, 112
  %v51 = vpop.permute.xlu0 %50
  %52 = vrot.lane.b32.xlu0 %v20, 112
  %v53 = vpop.permute.xlu0 %52
  %54 = vrot.lane.b32.xlu0 %v27, 112
  %v55 = vpop.permute.xlu0 %54
  %vm56 = vcmask 916480
  %v57 = vsel %vm56, %v51, %v53
  %v58 = vsel %vm56, %v53, %v55
  %61 = vrot.lane.b32.xlu0 %v20, 111
  %v62 = vpop.permute.xlu0 %61
  %63 = vrot.lane.b32.xlu0 %v23, 111
  %v64 = vpop.permute.xlu0 %63
  %65 = vrot.lane.b32.xlu0 %v21, 111
  %v66 = vpop.permute.xlu0 %65
  %vm67 = vcmask 908288
  %v68 = vsel %vm67, %v62, %v64
  %v69 = vsel %vm67, %v64, %v66
  %72 = vrot.lane.b32.xlu0 %v26, 110
  %v73 = vpop.permute.xlu0 %72
  %74 = vrot.lane.b32.xlu0 %v20, 110
  %v75 = vpop.permute.xlu0 %74
  %76 = vrot.lane.b32.xlu0 %v27, 110
  %v77 = vpop.permute.xlu0 %76
  %vm78 = vcmask 900096
  %v79 = vsel %vm78, %v73, %v75
  %v80 = vsel %vm78, %v75, %v77
  %83 = vrot.lane.b32.xlu0 %v20, 96
  %v84 = vpop.permute.xlu0 %83
  %85 = vrot.lane.b32.xlu0 %v23, 96
  %v86 = vpop.permute.xlu0 %85
  %87 = vrot.lane.b32.xlu0 %v21, 96
  %v88 = vpop.permute.xlu0 %87
  %vm89 = vcmask 785408
  %v90 = vsel %vm89, %v84, %v86
  %v91 = vsel %vm89, %v86, %v88
  %94 = vrot.lane.b32.xlu0 %v26, 95
  %v95 = vpop.permute.xlu0 %94
  %96 = vrot.lane.b32.xlu0 %v20, 95
  %v97 = vpop.permute.xlu0 %96
  %98 = vrot.lane.b32.xlu0 %v27, 95
  %v99 = vpop.permute.xlu0 %98
  %vm100 = vcmask 777216
  %v101 = vsel %vm100, %v95, %v97
  %v102 = vsel %vm100, %v97, %v99
  %105 = vrot.lane.b32.xlu0 %v20, 94
  %v106 = vpop.permute.xlu0 %105
  %107 = vrot.lane.b32.xlu0 %v23, 94
  %v108 = vpop.permute.xlu0 %107
  %109 = vrot.lane.b32.xlu0 %v21, 94
  %v110 = vpop.permute.xlu0 %109
  %vm111 = vcmask 769024
  %v112 = vsel %vm111, %v106, %v108
  %v113 = vsel %vm111, %v108, %v110
  %vm114 = vcmask 1043456
  %v115 = vsel %vm114, %v20, %v35
  %v116 = vsel %vm114, %v23, %v36
  %v117 = vsel %vm114, %v46, %v57
  %v118 = vsel %vm114, %v47, %v58
  %v119 = vsel %vm114, %v68, %v79
  %v120 = vsel %vm114, %v69, %v80
  %v121 = vsel %vm114, %v90, %v101
  %v122 = vsel %vm114, %v91, %v102
  %s123 = scalar_lea.vmem %s0, 12
  %v124 = vld [vmem:[%s123] sm:$0xff]
  %v125 = vld [vmem:[%s123 + $0x8] sm:$0xf]
  %v127 = vcombine.high %v124, %v124
  %v130 = vcombine.low %v124, %v124
  %v131 = vcombine.low %v125, %v125
  %132 = vrot.lane.b32.xlu0 %v130, 127
  %v133 = vpop.permute.xlu0 %132
  %134 = vrot.lane.b32.xlu0 %v124, 127
  %v135 = vpop.permute.xlu0 %134
  %136 = vrot.lane.b32.xlu0 %v131, 127
  %v137 = vpop.permute.xlu0 %136
  %v138 = vsel %vm34, %v133, %v135
  %v139 = vsel %vm34, %v135, %v137
  %142 = vrot.lane.b32.xlu0 %v124, 126
  %v143 = vpop.permute.xlu0 %142
  %144 = vrot.lane.b32.xlu0 %v127, 126
  %v145 = vpop.permute.xlu0 %144
  %146 = vrot.lane.b32.xlu0 %v125, 126
  %v147 = vpop.permute.xlu0 %146
  %v148 = vsel %vm45, %v143, %v145
  %v149 = vsel %vm45, %v145, %v147
  %152 = vrot.lane.b32.xlu0 %v130, 112
  %v153 = vpop.permute.xlu0 %152
  %154 = vrot.lane.b32.xlu0 %v124, 112
  %v155 = vpop.permute.xlu0 %154
  %156 = vrot.lane.b32.xlu0 %v131, 112
  %v157 = vpop.permute.xlu0 %156
  %v158 = vsel %vm56, %v153, %v155
  %v159 = vsel %vm56, %v155, %v157
  %162 = vrot.lane.b32.xlu0 %v124, 111
  %v163 = vpop.permute.xlu0 %162
  %164 = vrot.lane.b32.xlu0 %v127, 111
  %v165 = vpop.permute.xlu0 %164
  %166 = vrot.lane.b32.xlu0 %v125, 111
  %v167 = vpop.permute.xlu0 %166
  %v168 = vsel %vm67, %v163, %v165
  %v169 = vsel %vm67, %v165, %v167
  %172 = vrot.lane.b32.xlu0 %v130, 110
  %v173 = vpop.permute.xlu0 %172
  %174 = vrot.lane.b32.xlu0 %v124, 110
  %v175 = vpop.permute.xlu0 %174
  %176 = vrot.lane.b32.xlu0 %v131, 110
  %v177 = vpop.permute.xlu0 %176
  %v178 = vsel %vm78, %v173, %v175
  %v179 = vsel %vm78, %v175, %v177
  %182 = vrot.lane.b32.xlu0 %v124, 96
  %v183 = vpop.permute.xlu0 %182
  %184 = vrot.lane.b32.xlu0 %v127, 96
  %v185 = vpop.permute.xlu0 %184
  %186 = vrot.lane.b32.xlu0 %v125, 96
  %v187 = vpop.permute.xlu0 %186
  %v188 = vsel %vm89, %v183, %v185
  %v189 = vsel %vm89, %v185, %v187
  %192 = vrot.lane.b32.xlu0 %v130, 95
  %v193 = vpop.permute.xlu0 %192
  %194 = vrot.lane.b32.xlu0 %v124, 95
  %v195 = vpop.permute.xlu0 %194
  %196 = vrot.lane.b32.xlu0 %v131, 95
  %v197 = vpop.permute.xlu0 %196
  %v198 = vsel %vm100, %v193, %v195
  %v199 = vsel %vm100, %v195, %v197
  %202 = vrot.lane.b32.xlu0 %v124, 94
  %v203 = vpop.permute.xlu0 %202
  %204 = vrot.lane.b32.xlu0 %v127, 94
  %v205 = vpop.permute.xlu0 %204
  %206 = vrot.lane.b32.xlu0 %v125, 94
  %v207 = vpop.permute.xlu0 %206
  %v208 = vsel %vm111, %v203, %v205
  %v209 = vsel %vm111, %v205, %v207
  %v210 = vsel %vm114, %v124, %v138
  %v211 = vsel %vm114, %v127, %v139
  %v212 = vsel %vm114, %v148, %v158
  %v213 = vsel %vm114, %v149, %v159
  %v214 = vsel %vm114, %v168, %v178
  %v215 = vsel %vm114, %v169, %v179
  %v216 = vsel %vm114, %v188, %v198
  %v217 = vsel %vm114, %v189, %v199
  %v218 = vld [vmem:[%s1] sm:$0xff]
  %vm219 = vcmask 293888
  %v221 = vsel %vm219, %v218, 0
  %v223 = vsel %vm114, %v112, 0
  %v225 = vsel %vm114, %v113, 0
  %v227 = vsel %vm114, %v208, 0
  %v229 = vsel %vm114, %v209, 0
  %231 = vmatprep.subr.mxu0 %v116
  %232 = vmatpush1.msra.mxu0 %v115
  %233 = vmatprep.subr.mxu0 %v118
  %234 = vmatpush1.msra.mxu0 %v117
  %235 = vmatprep.subr.mxu0 %v120
  %236 = vmatpush1.msra.mxu0 %v119
  %237 = vmatprep.subr.mxu0 %v122
  %238 = vmatpush1.msra.mxu0 %v121
  %239 = vmatprep.subr.mxu0 %v225
  %240 = vmatpush1.msra.mxu0 %v223
  %241 = vmatprep.subr.mxu0 0.0
  %242 = vmatpush1.msra.mxu0 0.0
  %243 = vmatprep.subr.mxu0 0.0
  %244 = vmatpush1.msra.mxu0 0.0
  %245 = vmatprep.subr.mxu0 0.0
  %246 = vmatpush1.msra.mxu0 0.0
  %247 = vmatprep.subr.mxu0 0.0
  %248 = vmatpush1.msra.mxu0 0.0
  %249 = vmatprep.subr.mxu0 0.0
  %250 = vmatpush1.msra.mxu0 0.0
  %251 = vmatprep.subr.mxu0 0.0
  %252 = vmatpush1.msra.mxu0 0.0
  %253 = vmatprep.subr.mxu0 0.0
  %254 = vmatpush1.msra.mxu0 0.0
  %255 = vmatprep.subr.mxu0 0.0
  %256 = vmatpush1.msra.mxu0 0.0
  %257 = vmatprep.subr.mxu0 0.0
  %258 = vmatpush1.msra.mxu0 0.0
  %259 = vmatprep.subr.mxu0 0.0
  %260 = vmatpush1.msra.mxu0 0.0
  %261 = vmatprep.subr.mxu0 0.0
  %262 = vmatpush1.msra.mxu0 0.0
  %263 = vmatprep.subr.mxu0 0.0
  %264 = vmatpush1.msra.mxu0 0.0
  %265 = vmatprep.subr.mxu0 0.0
  %266 = vmatpush1.msra.mxu0 0.0
  %267 = vmatprep.subr.mxu0 0.0
  %268 = vmatpush1.msra.mxu0 0.0
  %269 = vmatprep.subr.mxu0 0.0
  %270 = vmatpush1.msra.mxu0 0.0
  %271 = vmatprep.subr.mxu0 0.0
  %272 = vmatpush1.msra.mxu0 0.0
  %273 = vmatprep.subr.mxu0 0.0
  %274 = vmatpush1.msra.mxu0 0.0
  %275 = vmatprep.subr.mxu0 0.0
  %276 = vmatpush1.msra.mxu0 0.0
  %277 = vmatprep.subr.mxu0 0.0
  %278 = vmatpush1.msra.mxu0 0.0
  %279 = vmatprep.subr.mxu0 0.0
  %280 = vmatpush1.msra.mxu0 0.0
  %281 = vmatprep.subr.mxu0 0.0
  %282 = vmatpush1.msra.mxu0 0.0
  %283 = vmatprep.subr.mxu0 0.0
  %284 = vmatpush1.msra.mxu0 0.0
  %285 = vmatprep.subr.mxu0 0.0
  %286 = vmatpush1.msra.mxu0 0.0
  %287 = vmatprep.subr.mxu0 0.0
  %288 = vmatpush1.msra.mxu0 0.0
  %289 = vmatprep.subr.mxu0 0.0
  %290 = vmatpush1.msra.mxu0 0.0
  %291 = vmatprep.subr.mxu0 0.0
  %292 = vmatpush1.msra.mxu0 0.0
  %293 = vmatprep.subr.mxu0 0.0
  %294 = vmatpush1.msra.mxu0 0.0
  %295 = vmatprep.mubr.f32.mxu0 0.0
  %296 = vmatmul.mubr.f32.gmra.mrb[0].mxu0 %v221
  %v297 = vpop.f32.mrb[0].mxu0
  %v298 = vadd.f32 0.0, %v297
  %v299 = vpop.f32.mrb[0].mxu0
  %v300 = vadd.f32 0.0, %v299
  %301 = vdwg.mxu0
  %302 = vmatprep.subr.mxu0 %v211
  %303 = vmatpush1.msra.mxu0 %v210
  %304 = vmatprep.subr.mxu0 %v213
  %305 = vmatpush1.msra.mxu0 %v212
  %306 = vmatprep.subr.mxu0 %v215
  %307 = vmatpush1.msra.mxu0 %v214
  %308 = vmatprep.subr.mxu0 %v217
  %309 = vmatpush1.msra.mxu0 %v216
  %310 = vmatprep.subr.mxu0 %v229
  %311 = vmatpush1.msra.mxu0 %v227
  %312 = vmatprep.subr.mxu0 0.0
  %313 = vmatpush1.msra.mxu0 0.0
  %314 = vmatprep.subr.mxu0 0.0
  %315 = vmatpush1.msra.mxu0 0.0
  %316 = vmatprep.subr.mxu0 0.0
  %317 = vmatpush1.msra.mxu0 0.0
  %318 = vmatprep.subr.mxu0 0.0
  %319 = vmatpush1.msra.mxu0 0.0
  %320 = vmatprep.subr.mxu0 0.0
  %321 = vmatpush1.msra.mxu0 0.0
  %322 = vmatprep.subr.mxu0 0.0
  %323 = vmatpush1.msra.mxu0 0.0
  %324 = vmatprep.subr.mxu0 0.0
  %325 = vmatpush1.msra.mxu0 0.0
  %326 = vmatprep.subr.mxu0 0.0
  %327 = vmatpush1.msra.mxu0 0.0
  %328 = vmatprep.subr.mxu0 0.0
  %329 = vmatpush1.msra.mxu0 0.0
  %330 = vmatprep.subr.mxu0 0.0
  %331 = vmatpush1.msra.mxu0 0.0
  %332 = vmatprep.subr.mxu0 0.0
  %333 = vmatpush1.msra.mxu0 0.0
  %334 = vmatprep.subr.mxu0 0.0
  %335 = vmatpush1.msra.mxu0 0.0
  %336 = vmatprep.subr.mxu0 0.0
  %337 = vmatpush1.msra.mxu0 0.0
  %338 = vmatprep.subr.mxu0 0.0
  %339 = vmatpush1.msra.mxu0 0.0
  %340 = vmatprep.subr.mxu0 0.0
  %341 = vmatpush1.msra.mxu0 0.0
  %342 = vmatprep.subr.mxu0 0.0
  %343 = vmatpush1.msra.mxu0 0.0
  %344 = vmatprep.subr.mxu0 0.0
  %345 = vmatpush1.msra.mxu0 0.0
  %346 = vmatprep.subr.mxu0 0.0
  %347 = vmatpush1.msra.mxu0 0.0
  %348 = vmatprep.subr.mxu0 0.0
  %349 = vmatpush1.msra.mxu0 0.0
  %350 = vmatprep.subr.mxu0 0.0
  %351 = vmatpush1.msra.mxu0 0.0
  %352 = vmatprep.subr.mxu0 0.0
  %353 = vmatpush1.msra.mxu0 0.0
  %354 = vmatprep.subr.mxu0 0.0
  %355 = vmatpush1.msra.mxu0 0.0
  %356 = vmatprep.subr.mxu0 0.0
  %357 = vmatpush1.msra.mxu0 0.0
  %358 = vmatprep.subr.mxu0 0.0
  %359 = vmatpush1.msra.mxu0 0.0
  %360 = vmatprep.subr.mxu0 0.0
  %361 = vmatpush1.msra.mxu0 0.0
  %362 = vmatprep.subr.mxu0 0.0
  %363 = vmatpush1.msra.mxu0 0.0
  %364 = vmatprep.subr.mxu0 0.0
  %365 = vmatpush1.msra.mxu0 0.0
  %366 = vmatprep.mubr.f32.mxu0 0.0
  %367 = vmatmul.mubr.f32.gmra.mrb[0].mxu0 %v221
  %v368 = vpop.f32.mrb[0].mxu0
  %v369 = vadd.f32 0.0, %v368
  %v370 = vpop.f32.mrb[0].mxu0
  %v371 = vadd.f32 0.0, %v370
  %372 = vdwg.mxu0
  %v373 = vld [vmem:[%s2] sm:$0xf]
  %v375 = vlaneseq
  %v376 = vshrl.u32 %v375, 7
  %v377 = vsub.s32 0, %v376
  %v378 = vrot.slane %v373, %v377
  %v379 = vlaneseq
  %v380 = vshrl.u32 %v379, 7
  %v381 = vsub.s32 1, %v380
  %v382 = vrot.slane %v373, %v381
  %v383 = vlaneseq
  %v384 = vshrl.u32 %v383, 7
  %v385 = vsub.s32 2, %v384
  %v386 = vrot.slane %v373, %v385
  %v387 = vlaneseq
  %v388 = vshrl.u32 %v387, 7
  %v389 = vsub.s32 3, %v388
  %v390 = vrot.slane %v373, %v389
  %v395 = vmul.f32 %v298, %v378
  %v396 = vmul.f32 %v300, %v382
  %v397 = vmul.f32 %v369, %v386
  %v398 = vmul.f32 %v371, %v390
  %v399 = vadd.f32 %v395, %v396
  %v400 = vadd.f32 %v399, %v397
  %v401 = vadd.f32 %v400, %v398
  %402 = vadd.xlane.f32.xlu0 %v401
  %v403 = vpop.xlane.xlu0 %402
  %v404 = vmul.f32 %v403, 0.0025510204
  %v405 = vsub.f32 %v298, %v404
  %v406 = vsub.f32 %v300, %v404
  %v407 = vsub.f32 %v369, %v404
  %v408 = vsub.f32 %v371, %v404
  %v409 = vmul.f32 %v405, %v378
  %v410 = vmul.f32 %v406, %v382
  %v411 = vmul.f32 %v407, %v386
  %v412 = vmul.f32 %v408, %v390
  %v413 = vmul.f32 %v409, %v409
  %v414 = vmul.f32 %v410, %v410
  %v415 = vmul.f32 %v411, %v411
  %v416 = vmul.f32 %v412, %v412
  %v417 = vadd.f32 %v413, %v414
  %v418 = vadd.f32 %v417, %v415
  %v419 = vadd.f32 %v418, %v416
  %420 = vadd.xlane.f32.xlu0 %v419
  %v421 = vpop.xlane.xlu0 %420
  %v422 = vmul.f32 %v421, 0.0025510204
  %v423 = vadd.f32 %v422, 1e-05
  %v424 = vrsqrt.pop %v423
  %v425 = vld [vmem:[%s3] sm:$0xff]
  %v426 = vmul.f32 %v425, %v424
  %v427 = vld [vmem:[%s4] sm:$0xff]
  %v428 = vmul.f32 %v404, %v426
  %v429 = vsub.f32 %v427, %v428
  %431 = vset.pattern.permute.xlu0 0
  %432 = vperm.xlu0 %431, %v426
  %v433 = vpop.permute.xlu0 %432
  %v435 = vmul.f32 %v298, %v433
  %v436 = vmul.f32 %v300, %v433
  %v437 = vmul.f32 %v369, %v433
  %v438 = vmul.f32 %v371, %v433
  %440 = vset.pattern.permute.xlu0 0
  %441 = vperm.xlu0 %440, %v429
  %v442 = vpop.permute.xlu0 %441
  %v444 = vadd.f32 %v435, %v442
  %v445 = vadd.f32 %v436, %v442
  %v446 = vadd.f32 %v437, %v442
  %v447 = vadd.f32 %v438, %v442
  %v448 = vmax.f32 %v444, 0.0
  %v449 = vmax.f32 %v445, 0.0
  %v450 = vmax.f32 %v446, 0.0
  %v451 = vmax.f32 %v447, 0.0
  %v452 = vmin.f32 %v448, 6.0
  %v453 = vmin.f32 %v449, 6.0
  %v454 = vmin.f32 %v450, 6.0
  %v455 = vmin.f32 %v451, 6.0
  %456 = vst [vmem:[%s5] sm:$0xff] %v452
  %457 = vst [vmem:[%s5 + $0x8] sm:$0xff] %v453
  %s458 = scalar_lea.vmem %s5, 16
  %459 = vst [vmem:[%s458] sm:$0xff] %v454
  %460 = vst [vmem:[%s458 + $0x8] sm:$0xff] %v455
  // Predicated region
  $region22: #{conv_block_forward.1} parent=0 // pred_check
    _
  $region23: #{conv_block_forward.1} parent=0 // pred_check_branch
    %462 = sbr.rel (0) target = $region25
  $region24: #{conv_block_forward.1} parent=0 // pred_region
    _
  $region25: #{conv_block_forward.1} parent=0 // pred_fallthru
    _
  // Predicated region
  $region26: #{conv_block_forward.1} parent=0 // pred_check
    _
  $region27: #{conv_block_forward.1} parent=0 // pred_check_branch
    %464 = sbr.rel (0) target = $region29
  $region28: #{conv_block_forward.1} parent=0 // pred_region
    _
  $region29: #{conv_block_forward.1} parent=0 // pred_fallthru
    _

</llo_original>
